<compile_context>
chip_gen: v7x
topology: tpu7x:2x2x1
jax: 0.10.0
libtpu: 0.0.40
codegen_flags: <defaults>
</compile_context>

<pallas_src>
import functools

import jax
import jax.numpy as jnp
from jax.experimental import pallas as pl
from jax.experimental.pallas import tpu as pltpu

_LANES = 128
_SUBLANES = 8


def _mse_partial_kernel(pred_ref, target_ref, out_ref, *,
                        rows, block_rows, needs_mask, same_dtype):
    """Writes the (1, 8, 128) partial sum of (pred - target)^2 for this tile."""
    i = pl.program_id(0)

    # Single widening cast when dtypes already match (bf16 fast path on
    # v6e/v7x, a no-op for f32); otherwise promote both operands in-register.
    if same_dtype:
        d = (pred_ref[...] - target_ref[...]).astype(jnp.float32)
    else:
        d = pred_ref[...].astype(jnp.float32) - target_ref[...].astype(jnp.float32)

    def partial(dd):
        sq = dd * dd
        # Fold sublane groups only: (block_rows,128) -> (g,8,128) -> (8,128).
        # Pure VALU vreg adds; no XLU / cross-lane work in the kernel.
        return jnp.sum(
            sq.reshape(block_rows // _SUBLANES, _SUBLANES, _LANES), axis=0
        ).reshape(1, _SUBLANES, _LANES)

    if needs_mask:
        last = pl.num_programs(0) - 1

        @pl.when(i < last)
        def _full_tile():
            out_ref[...] = partial(d)

        @pl.when(i == last)
        def _ragged_tile():
            # Mask rows past the true extent BEFORE squaring so uninitialized
            # out-of-bounds data never propagates NaN/Inf into the sum.
            row_idx = i * block_rows + jax.lax.broadcasted_iota(
                jnp.int32, d.shape, 0)
            out_ref[...] = partial(jnp.where(row_idx < rows, d, 0.0))
    else:
        out_ref[...] = partial(d)


def mse_loss_pallas(pred, target, *, block_rows=4096):
    """mean((pred - target)**2) over all elements via a Pallas TPU kernel."""
    assert pred.shape == target.shape, "MSELoss requires matching shapes"
    n = pred.size
    out_dtype = jnp.promote_types(pred.dtype, target.dtype)

    # Lane-dense (rows, 128) views.  No wrapper-side astype; the kernel widens.
    p = jnp.reshape(pred, (-1,))
    t = jnp.reshape(target, (-1,))
    pad = (-n) % _LANES
    if pad:
        # TODO(synk): the sub-128 tail still pays a host-side pad copy; the hot
        # path (n % 128 == 0, e.g. typical NCHW activations) is copy-free.
        p = jnp.pad(p, (0, pad))
        t = jnp.pad(t, (0, pad))
    rows = (n + pad) // _LANES
    p = p.reshape(rows, _LANES)
    t = t.reshape(rows, _LANES)

    # Big tiles amortize the ~0.35 us/step pipeline overhead; cap to the data.
    block_rows = max(_SUBLANES,
                     min(block_rows, pl.cdiv(rows, _SUBLANES) * _SUBLANES))
    assert block_rows % _SUBLANES == 0
    row_blocks = pl.cdiv(rows, block_rows)
    needs_mask = (row_blocks * block_rows) != rows

    partials = pl.pallas_call(
        functools.partial(_mse_partial_kernel,
                          rows=rows, block_rows=block_rows,
                          needs_mask=needs_mask,
                          same_dtype=(p.dtype == t.dtype)),
        out_shape=jax.ShapeDtypeStruct((row_blocks, _SUBLANES, _LANES),
                                       jnp.float32),
        grid_spec=pltpu.PrefetchScalarGridSpec(
            num_scalar_prefetch=0,
            grid=(row_blocks,),
            in_specs=[
                pl.BlockSpec((block_rows, _LANES), lambda i: (i, 0)),
                pl.BlockSpec((block_rows, _LANES), lambda i: (i, 0)),
            ],
            out_specs=pl.BlockSpec((1, _SUBLANES, _LANES),
                                   lambda i: (i, 0, 0)),
        ),
        compiler_params=pltpu.CompilerParams(
            # Independent per-tile partials: split across TensorCores on v7x.
            dimension_semantics=("parallel",),
            # Double-buffered f32 inputs at block_rows=4096 need ~8 MiB; raise
            # the scoped limit so bigger tiles also fit (v5e default is 16 MiB).
            vmem_limit_bytes=32 * 1024 * 1024,
        ),
    )(p, t)

    loss = jnp.sum(partials) / jnp.float32(n)
    if jnp.issubdtype(out_dtype, jnp.floating):
        loss = loss.astype(out_dtype)   # dtype parity with torch.nn.MSELoss
    return loss


if __name__ == "__main__":
    # SigmoidMAELoss has no learnable parameters; only pred/target inputs.
    key = jax.random.PRNGKey(0)
    k1, k2 = jax.random.split(key)
    shape = (2, 4, 16, 16)  # small NCHW-style example
    pred = jax.random.normal(k1, shape, dtype=jnp.float32)
    target = jax.random.normal(k2, shape, dtype=jnp.float32)

    loss = mse_loss_pallas(pred, target)
    jax.block_until_ready(loss)

    # sanity check against plain-JAX reference
    ref = jnp.mean((pred - target) ** 2)
    assert jnp.allclose(loss, ref, rtol=1e-5, atol=1e-6), (loss, ref)

    print("KERNEL_OK")
</pallas_src>

<mosaic_0001>
module attributes {stable_mosaic.version = 11 : i64} {
  func.func @_mse_partial_kernel(%arg0: i32, %arg1: memref<16x128xf32, #tpu.memory_space<vmem>>, %arg2: memref<16x128xf32, #tpu.memory_space<vmem>>, %arg3: memref<1x8x128xf32, #tpu.memory_space<vmem>>) attributes {dimension_semantics = [#tpu.dimension_semantics<parallel>], iteration_bounds = array<i64: 1>, scalar_prefetch = 0 : i64, scratch_operands = 0 : i64, tpu.core_type = #tpu.core_type<tc>, window_params = [{transform_indices = @transform_0, window_bounds = array<i64: 16, 128>}, {transform_indices = @transform_1, window_bounds = array<i64: 16, 128>}, {transform_indices = @transform_2, window_bounds = array<i64: 1, 8, 128>}]} {
    %c0 = arith.constant 0 : index
    %c0_0 = arith.constant 0 : index
    %0 = vector.load %arg1[%c0, %c0_0] : memref<16x128xf32, #tpu.memory_space<vmem>>, vector<16x128xf32>
    %c0_1 = arith.constant 0 : index
    %c0_2 = arith.constant 0 : index
    %1 = vector.load %arg2[%c0_1, %c0_2] : memref<16x128xf32, #tpu.memory_space<vmem>>, vector<16x128xf32>
    %2 = arith.subf %0, %1 : vector<16x128xf32>
    %3 = arith.mulf %2, %2 : vector<16x128xf32>
    %4 = vector.shape_cast %3 : vector<16x128xf32> to vector<2x8x128xf32>
    %cst = arith.constant dense<0.000000e+00> : vector<8x128xf32>
    %5 = vector.multi_reduction <add>, %4, %cst [0] : vector<2x8x128xf32> to vector<8x128xf32>
    %6 = vector.shape_cast %5 : vector<8x128xf32> to vector<1x8x128xf32>
    %c0_3 = arith.constant 0 : index
    %c0_4 = arith.constant 0 : index
    %c0_5 = arith.constant 0 : index
    %7 = vector.load %arg3[%c0_3, %c0_4, %c0_5] : memref<1x8x128xf32, #tpu.memory_space<vmem>>, vector<1x8x128xf32>
    tpu.vector_store %arg3[%c0_3, %c0_4, %c0_5], %6 {strides = array<i32>} : memref<1x8x128xf32, #tpu.memory_space<vmem>>, vector<1x8x128xf32>,
    return
  }
  func.func @transform_0(%arg0: i32) -> (i32, i32) {
    %c0_i32 = arith.constant 0 : i32
    %c0_i32_0 = arith.constant 0 : i32
    return %arg0, %c0_i32 : i32, i32
  }
  func.func @transform_1(%arg0: i32) -> (i32, i32) {
    %c0_i32 = arith.constant 0 : i32
    %c0_i32_0 = arith.constant 0 : i32
    return %arg0, %c0_i32 : i32, i32
  }
  func.func @transform_2(%arg0: i32) -> (i32, i32, i32) {
    %c0_i32 = arith.constant 0 : i32
    %c0_i32_0 = arith.constant 0 : i32
    %c0_i32_1 = arith.constant 0 : i32
    return %arg0, %c0_i32, %c0_i32_0 : i32, i32, i32
  }
}

</mosaic_0001>

<llo_original>
// kernel: tpu_custom_call.1
$region0: #{tpu_custom_call.1}
  #allocation0 [shape = 'u32[]', space=smem, size = 0x4, offset = 0x4, fixed_abs, tag = 'smem constant byte address 0x4 - core index']
  #allocation1 [shape = 'u32[144,128]{1,0:T(1,128)}', space=vmem, size = 0x12000, scoped, tag = 'internal scratch']
  %s0 = inlined_call_operand.hbm [shape: f32[16,128], index: 0, kind: input, shape index: {}]
  %s1 = inlined_call_operand.hbm [shape: f32[16,128], index: 1, kind: input, shape index: {}]
  %s2 = inlined_call_operand.hbm [shape: f32[1,8,128], index: 2, kind: output, shape index: {}]
  %s3 = sld [smem:[#allocation0]]
  $region26: #{tpu_custom_call.1} parent=0
    _
  %s5 = ssub.s32 1, %s3
  %s6 = scalar_select 0, %s5, %s3
  $region1: #{tpu_custom_call.1} parent=0
    #allocation2 [shape = 'u8[8192]{0}', space=vmem, size = 0x2000, scoped, tag = 'input window, operand 0, single buffered']
    #allocation3 [shape = 's32[1]{0}', space=sflag, size = 0x4, scoped, tag = 'scoped memory for tpu_custom_call.1']
    #allocation4 [shape = 's32[1]{0}', space=sflag, size = 0x4, scoped, tag = 'scoped memory for tpu_custom_call.1']
    #allocation5 [shape = 'u8[8192]{0}', space=vmem, size = 0x2000, scoped, tag = 'input window, operand 1, single buffered']
    #allocation6 [shape = 's32[1]{0}', space=sflag, size = 0x4, scoped, tag = 'scoped memory for tpu_custom_call.1']
    #allocation7 [shape = 'u8[4096]{0}', space=vmem, size = 0x1000, scoped, tag = 'output window, operand 0, single buffered']
    %7 = vsyncpa [#allocation3], 0
    %8 = vsyncpa [#allocation6], 0
    %9 = vsyncpa [#allocation4], 0
    // Predicated region
    $region2: #{tpu_custom_call.1} parent=1 // pred_check
      _
    $region3: #{tpu_custom_call.1} parent=1 // pred_check_branch
      %11 = sbr.rel (0) target = $region5
    $region4: #{tpu_custom_call.1} parent=1 // pred_region
      %s13 = ssub.s32 256, 256
      %14 = vsyncadd [#allocation3], %s13
      %s15 = sshll.u32 [#allocation2], 4
      %s16 = int_to_ptr.vmem [resolvable:$true] %s15
      %21 = dma.hbm_to_vmem [thread:$0]  %s0, 256, %s16, [#allocation3], 128, 128, 8
    $region5: #{tpu_custom_call.1} parent=1 // pred_fallthru
      _
    // Predicated region
    $region6: #{tpu_custom_call.1} parent=1 // pred_check
      _
    $region7: #{tpu_custom_call.1} parent=1 // pred_check_branch
      %23 = sbr.rel (0) target = $region9
    $region8: #{tpu_custom_call.1} parent=1 // pred_region
      %s25 = ssub.s32 256, 256
      %26 = vsyncadd [#allocation6], %s25
      %s27 = sshll.u32 [#allocation5], 4
      %s28 = int_to_ptr.vmem [resolvable:$true] %s27
      %33 = dma.hbm_to_vmem [thread:$0]  %s1, 256, %s28, [#allocation6], 128, 128, 8
    $region9: #{tpu_custom_call.1} parent=1 // pred_fallthru
      _
    // Predicated region
    $region10: #{tpu_custom_call.1} parent=1 // pred_check
      _
    $region11: #{tpu_custom_call.1} parent=1 // pred_check_branch
      %35 = sbr.rel (0) target = $region13
    $region12: #{tpu_custom_call.1} parent=1 // pred_region
      %36 = dma.done [#allocation3], 256
    $region13: #{tpu_custom_call.1} parent=1 // pred_fallthru
      _
    // Predicated region
    $region14: #{tpu_custom_call.1} parent=1 // pred_check
      _
    $region15: #{tpu_custom_call.1} parent=1 // pred_check_branch
      %38 = sbr.rel (0) target = $region17
    $region16: #{tpu_custom_call.1} parent=1 // pred_region
      %39 = dma.done [#allocation6], 256
    $region17: #{tpu_custom_call.1} parent=1 // pred_fallthru
      _
    %v40 = vld [vmem:[#allocation2] sm:$0xff]
    %v41 = vld [vmem:[#allocation2 + $0x8] sm:$0xff]
    %v42 = vld [vmem:[#allocation5] sm:$0xff]
    %v43 = vld [vmem:[#allocation5 + $0x8] sm:$0xff]
    %v44 = vsub.f32 %v40, %v42
    %v45 = vsub.f32 %v41, %v43
    %v46 = vmul.f32 %v44, %v44
    %v47 = vmul.f32 %v45, %v45
    %v48 = vadd.f32 %v46, %v47
    %49 = vst [vmem:[#allocation7] sm:$0xff] %v48
    // Predicated region
    $region18: #{tpu_custom_call.1} parent=1 // pred_check
      _
    $region19: #{tpu_custom_call.1} parent=1 // pred_check_branch
      %51 = sbr.rel (0) target = $region21
    $region20: #{tpu_custom_call.1} parent=1 // pred_region
      %s53 = ssub.s32 128, 128
      %54 = vsyncadd [#allocation4], %s53
      %s56 = sshll.u32 [#allocation7], 4
      %s57 = int_to_ptr.vmem [resolvable:$true] %s56
      %59 = dma.vmem_to_hbm [thread:$0]  %s57, 128, %s2, [#allocation4]
    $region21: #{tpu_custom_call.1} parent=1 // pred_fallthru
      _
    // Predicated region
    $region22: #{tpu_custom_call.1} parent=1 // pred_check
      _
    $region23: #{tpu_custom_call.1} parent=1 // pred_check_branch
      %61 = sbr.rel (0) target = $region25
    $region24: #{tpu_custom_call.1} parent=1 // pred_region
      %62 = dma.done [#allocation4], 128
    $region25: #{tpu_custom_call.1} parent=1 // pred_fallthru
      _
    %63 = vsyncpa [#allocation3], 1
    %64 = vsyncpa [#allocation6], 1
    %65 = vsyncpa [#allocation4], 1

</llo_original>
